<compile_context>
chip_gen: v7x
topology: tpu7x:2x2x1
jax: 0.10.0
libtpu: 0.0.40
codegen_flags: <defaults>
</compile_context>

<pallas_src>
import functools

import jax
import jax.numpy as jnp
from jax import lax
from jax.experimental import pallas as pl
from jax.experimental.pallas import tpu as pltpu


def _matrix_power(m, n):
    """m^n via binary exponentiation (n is a compile-time Python int, n >= 1)."""
    result = None
    base = m
    while n > 0:
        if n & 1:
            result = base if result is None else jnp.dot(
                result, base, preferred_element_type=jnp.float32)
        n >>= 1
        if n:
            base = jnp.dot(base, base, preferred_element_type=jnp.float32)
    return result


def _bmm(a, b):
    # Batched [B,V,V] @ [B,V,V] on the MXU; the B independent matmuls pipeline
    # and hide result-FIFO drain latency on v5e/v6e.
    return jnp.einsum('bij,bjk->bik', a, b, preferred_element_type=jnp.float32)


def _geometric_sum(m, n, eye, need_power=True):
    """Return (S, P): S = sum_{k=0}^{n-1} m^k, P = m^n (None if not needed).

    n is a compile-time Python int >= 1; m / eye are batched [B, V, V].
    Doubling trick: S_{2h} = S_h + m^h @ S_h, so the dependent matmul chain is
    O(log n) instead of n.
    """
    if n == 1:
        return eye, (m if need_power else None)
    if n == 2:
        return eye + m, (_bmm(m, m) if need_power else None)
    if n % 2 == 0:
        s_h, p_h = _geometric_sum(m, n // 2, eye, need_power=True)
        s = s_h + _bmm(p_h, s_h)
        p = _bmm(p_h, p_h) if need_power else None
        return s, p
    s_p, p_p = _geometric_sum(m, n - 1, eye, need_power=need_power)
    s = eye + _bmm(m, s_p)
    p = _bmm(m, p_p) if need_power else None
    return s, p


def _causal_kernel(num_variables, has_interventions, *refs):
    if has_interventions:
        x_ref, interv_ref, logits_ref, strengths_ref, out_ref = refs
    else:
        x_ref, logits_ref, strengths_ref, out_ref = refs

    v = num_variables
    # self_loop_mask (1 - eye) is recomputed in-kernel from iotas (no DMA).
    row = lax.broadcasted_iota(jnp.int32, (v, v), 0)
    col = lax.broadcasted_iota(jnp.int32, (v, v), 1)
    diag = row == col

    logits = logits_ref[...].astype(jnp.float32)
    strengths = strengths_ref[...].astype(jnp.float32)
    masked_logits = jnp.where(diag, 0.0, logits)                # logits * (1 - eye)
    adj = jax.nn.sigmoid(masked_logits) * jnp.tanh(strengths)   # weighted adjacency
    # Fold the residual add into the matmul: effects_{t+1} = effects_t @ (I + adj)
    m = jnp.where(diag, adj + 1.0, adj)

    x = x_ref[...].astype(jnp.float32)

    if not has_interventions:
        if v > 0:
            # x @ (I + adj)^V via ceil(log2 V) squarings + one [B,V]@[V,V] (MXU).
            m_pow = _matrix_power(m, v)
            effects = jnp.dot(x, m_pow, preferred_element_type=jnp.float32)
        else:
            effects = x
    else:
        interv = interv_ref[...].astype(jnp.float32)
        x_interv = x * interv
        batch = x.shape[0]
        # Exact closed form of the V-step blend recurrence:
        #   e_{t+1} = (e_t @ M) * (1 - i) + x * i ,   e_0 = x * i
        #   =>  e_V = (x * i) @ sum_{k=0}^{V} M_i^k
        #       with M_i[b,j,k] = M[j,k] * (1 - i[b,k])   (per-batch column scale)
        m_b = m[None, :, :] * (1.0 - interv)[:, None, :]
        eye_b = jnp.broadcast_to(diag.astype(jnp.float32), (batch, v, v))
        s, _ = _geometric_sum(m_b, v + 1, eye_b, need_power=False)
        # effects[b, k] = sum_j x_interv[b, j] * S[b, j, k]   (= (x*i)[b] @ S_b)
        effects = jnp.sum(x_interv[:, :, None] * s, axis=1)

    out_ref[...] = effects.astype(out_ref.dtype)


def causal_graph_forward(inputs, edge_logits, edge_strengths, interventions=None):
    """Pallas equivalent of CausalGraph.forward.

    Note: the module's self_loop_mask buffer (1 - eye) is deterministic and is
    recomputed inside the kernel, so it is not an input here.
    """
    batch, num_variables = inputs.shape
    has_interventions = interventions is not None

    kernel = functools.partial(_causal_kernel, num_variables, has_interventions)

    args = [inputs]
    if has_interventions:
        args.append(interventions)
    args += [edge_logits, edge_strengths]

    # Small shapes: single grid point, every operand fully VMEM-resident.
    in_specs = [pl.BlockSpec(memory_space=pltpu.VMEM) for _ in args]
    out_spec = pl.BlockSpec(memory_space=pltpu.VMEM)

    # Advisory cost estimate so XLA schedules around this tiny custom call well.
    v2 = num_variables * num_variables
    v3 = v2 * num_variables
    if has_interventions:
        n_mm = 2 * max(1, (num_variables + 1).bit_length())
        flops = 2 * n_mm * batch * v3 + 8 * batch * v2
    else:
        n_mm = 2 * max(1, max(1, num_variables).bit_length())
        flops = 2 * n_mm * v3 + 2 * batch * v2
    bytes_accessed = sum(int(a.size) * a.dtype.itemsize for a in args)
    bytes_accessed += batch * num_variables * jnp.dtype(inputs.dtype).itemsize
    cost = pl.CostEstimate(flops=int(flops),
                           transcendentals=int(2 * v2),
                           bytes_accessed=int(bytes_accessed))

    # TODO(synk): scale-up path (not needed at these shapes): add a batch grid
    # axis marked "parallel" (v7x has 2 TCs) with constant-index BlockSpecs for
    # the [V,V] params, pad the output lane dim to a multiple of 128, cast the
    # squaring chain to bf16 for large V, and set vmem_limit_bytes explicitly
    # (v7x physical VMEM is 64 MiB vs 128 MiB on v5e/v6e).
    return pl.pallas_call(
        kernel,
        out_shape=jax.ShapeDtypeStruct((batch, num_variables), inputs.dtype),
        in_specs=in_specs,
        out_specs=out_spec,
        cost_estimate=cost,
    )(*args)


def causal_graph_forward_ref(inputs, edge_logits, edge_strengths, interventions=None):
    """Pure-JAX reference mirroring the PyTorch forward exactly."""
    num_variables = inputs.shape[1]
    self_loop_mask = 1.0 - jnp.eye(num_variables, dtype=jnp.float32)
    adj = jax.nn.sigmoid(edge_logits * self_loop_mask) * jnp.tanh(edge_strengths)
    effects = inputs
    if interventions is not None:
        effects = effects * interventions
    for _ in range(num_variables):
        effects = effects + jnp.dot(effects, adj, precision=lax.Precision.HIGHEST)
        if interventions is not None:
            effects = effects * (1.0 - interventions) + inputs * interventions
    return effects


if __name__ == "__main__":
    num_variables = 16
    batch = 8

    key = jax.random.PRNGKey(0)
    k_in, k_logits, k_str = jax.random.split(key, 3)

    # The PyTorch module initializes edge_logits / edge_strengths to zeros
    # (which makes forward ~identity); use small random values so the kernel
    # exercises a non-trivial path.
    edge_logits = 0.3 * jax.random.normal(k_logits, (num_variables, num_variables), jnp.float32)
    edge_strengths = 0.1 * jax.random.normal(k_str, (num_variables, num_variables), jnp.float32)
    inputs = jax.random.normal(k_in, (batch, num_variables), jnp.float32)

    # 1) forward without interventions
    out = causal_graph_forward(inputs, edge_logits, edge_strengths)
    out = jax.block_until_ready(out)
    ref = causal_graph_forward_ref(inputs, edge_logits, edge_strengths)
    assert out.dtype == inputs.dtype
    assert jnp.allclose(out, ref, atol=1e-3, rtol=1e-3), "mismatch (no interventions)"

    # 2) forward with interventions (intervene on variable 3)
    interventions = jnp.zeros((batch, num_variables), jnp.float32).at[:, 3].set(1.0)
    out_i = causal_graph_forward(inputs, edge_logits, edge_strengths,
                                 interventions=interventions)
    out_i = jax.block_until_ready(out_i)
    ref_i = causal_graph_forward_ref(inputs, edge_logits, edge_strengths,
                                     interventions=interventions)
    assert jnp.allclose(out_i, ref_i, atol=1e-3, rtol=1e-3), "mismatch (interventions)"

    # 3) non-binary interventions (closed form must stay exact for soft values)
    soft_interv = jnp.zeros((batch, num_variables), jnp.float32).at[:, 5].set(0.5)
    out_s = causal_graph_forward(inputs, edge_logits, edge_strengths,
                                 interventions=soft_interv)
    out_s = jax.block_until_ready(out_s)
    ref_s = causal_graph_forward_ref(inputs, edge_logits, edge_strengths,
                                     interventions=soft_interv)
    assert jnp.allclose(out_s, ref_s, atol=1e-3, rtol=1e-3), "mismatch (soft interventions)"

    print("KERNEL_OK")
</pallas_src>

<mosaic_0001>
module attributes {stable_mosaic.version = 11 : i64} {
  func.func @_causal_kernel(%arg0: memref<8x16xf32, #tpu.memory_space<vmem>>, %arg1: memref<16x16xf32, #tpu.memory_space<vmem>>, %arg2: memref<16x16xf32, #tpu.memory_space<vmem>>, %arg3: memref<8x16xf32, #tpu.memory_space<vmem>>) attributes {dimension_semantics = [], scalar_prefetch = 0 : i64, scratch_operands = 0 : i64, tpu.core_type = #tpu.core_type<tc>} {
    %0 = tpu.iota {dimensions = array<i32: 0>} : vector<16x16xi32>
    %1 = tpu.iota {dimensions = array<i32: 1>} : vector<16x16xi32>
    %2 = arith.cmpi eq, %0, %1 : vector<16x16xi32>
    %c0 = arith.constant 0 : index
    %c0_0 = arith.constant 0 : index
    %3 = vector.load %arg1[%c0, %c0_0] : memref<16x16xf32, #tpu.memory_space<vmem>>, vector<16x16xf32>
    %c0_1 = arith.constant 0 : index
    %c0_2 = arith.constant 0 : index
    %4 = vector.load %arg2[%c0_1, %c0_2] : memref<16x16xf32, #tpu.memory_space<vmem>>, vector<16x16xf32>
    %cst = arith.constant 0.000000e+00 : f32
    %5 = vector.broadcast %cst : f32 to vector<16x16xf32>
    %6 = arith.select %2, %5, %3 : vector<16x16xi1>, vector<16x16xf32>
    %7 = arith.negf %6 : vector<16x16xf32>
    %8 = math.exp %7 : vector<16x16xf32>
    %cst_3 = arith.constant 1.000000e+00 : f32
    %9 = vector.broadcast %cst_3 : f32 to vector<16x16xf32>
    %10 = arith.addf %9, %8 : vector<16x16xf32>
    %11 = arith.divf %9, %10 : vector<16x16xf32>
    %12 = math.tanh %4 : vector<16x16xf32>
    %13 = arith.mulf %11, %12 : vector<16x16xf32>
    %cst_4 = arith.constant 1.000000e+00 : f32
    %14 = vector.broadcast %cst_4 : f32 to vector<16x16xf32>
    %15 = arith.addf %13, %14 : vector<16x16xf32>
    %16 = arith.select %2, %15, %13 : vector<16x16xi1>, vector<16x16xf32>
    %c0_5 = arith.constant 0 : index
    %c0_6 = arith.constant 0 : index
    %17 = vector.load %arg0[%c0_5, %c0_6] : memref<8x16xf32, #tpu.memory_space<vmem>>, vector<8x16xf32>
    %cst_7 = arith.constant dense<0.000000e+00> : vector<16x16xf32>
    %18 = tpu.matmul %16, %16, %cst_7 {dimension_numbers = #tpu.dot_dimension_numbers<[1], [0], [0], [1], [0, 0, 1, 1], [], []>} : vector<16x16xf32>, vector<16x16xf32>, vector<16x16xf32> -> vector<16x16xf32>
    %cst_8 = arith.constant dense<0.000000e+00> : vector<16x16xf32>
    %19 = tpu.matmul %18, %18, %cst_8 {dimension_numbers = #tpu.dot_dimension_numbers<[1], [0], [0], [1], [0, 0, 1, 1], [], []>} : vector<16x16xf32>, vector<16x16xf32>, vector<16x16xf32> -> vector<16x16xf32>
    %cst_9 = arith.constant dense<0.000000e+00> : vector<16x16xf32>
    %20 = tpu.matmul %19, %19, %cst_9 {dimension_numbers = #tpu.dot_dimension_numbers<[1], [0], [0], [1], [0, 0, 1, 1], [], []>} : vector<16x16xf32>, vector<16x16xf32>, vector<16x16xf32> -> vector<16x16xf32>
    %cst_10 = arith.constant dense<0.000000e+00> : vector<16x16xf32>
    %21 = tpu.matmul %20, %20, %cst_10 {dimension_numbers = #tpu.dot_dimension_numbers<[1], [0], [0], [1], [0, 0, 1, 1], [], []>} : vector<16x16xf32>, vector<16x16xf32>, vector<16x16xf32> -> vector<16x16xf32>
    %cst_11 = arith.constant dense<0.000000e+00> : vector<8x16xf32>
    %22 = tpu.matmul %17, %21, %cst_11 {dimension_numbers = #tpu.dot_dimension_numbers<[1], [0], [0], [1], [0, 0, 1, 1], [], []>} : vector<8x16xf32>, vector<16x16xf32>, vector<8x16xf32> -> vector<8x16xf32>
    %c0_12 = arith.constant 0 : index
    %c0_13 = arith.constant 0 : index
    %23 = vector.load %arg3[%c0_12, %c0_13] : memref<8x16xf32, #tpu.memory_space<vmem>>, vector<8x16xf32>
    tpu.vector_store %arg3[%c0_12, %c0_13], %22 {strides = array<i32>} : memref<8x16xf32, #tpu.memory_space<vmem>>, vector<8x16xf32>,
    return
  }
}

</mosaic_0001>

<llo_original>
// kernel: tpu_custom_call.1
$region0: #{tpu_custom_call.1}
  #allocation0 [shape = 'u32[]', space=smem, size = 0x4, offset = 0x4, fixed_abs, tag = 'smem constant byte address 0x4 - core index']
  #allocation1 [shape = 'u32[144,128]{1,0:T(1,128)}', space=vmem, size = 0x12000, scoped, tag = 'internal scratch']
  %s0 = inlined_call_operand.hbm [shape: f32[8,16], index: 0, kind: input, shape index: {}]
  %s1 = inlined_call_operand.hbm [shape: f32[16,16], index: 1, kind: input, shape index: {}]
  %s2 = inlined_call_operand.hbm [shape: f32[16,16], index: 2, kind: input, shape index: {}]
  %s3 = inlined_call_operand.hbm [shape: f32[8,16], index: 3, kind: output, shape index: {}]
  %s4 = sld [smem:[#allocation0]]
  $region34: #{tpu_custom_call.1} parent=0
    _
  %s6 = ssub.s32 1, %s4
  %s7 = scalar_select 0, %s6, %s4
  $region1: #{tpu_custom_call.1} parent=0
    #allocation2 [shape = 'u8[4096]{0}', space=vmem, size = 0x1000, scoped, tag = 'input window, operand 0, single buffered']
    #allocation3 [shape = 's32[1]{0}', space=sflag, size = 0x4, scoped, tag = 'scoped memory for tpu_custom_call.1']
    #allocation4 [shape = 's32[1]{0}', space=sflag, size = 0x4, scoped, tag = 'scoped memory for tpu_custom_call.1']
    #allocation5 [shape = 'u8[8192]{0}', space=vmem, size = 0x2000, scoped, tag = 'input window, operand 1, single buffered']
    #allocation6 [shape = 's32[1]{0}', space=sflag, size = 0x4, scoped, tag = 'scoped memory for tpu_custom_call.1']
    #allocation7 [shape = 'u8[8192]{0}', space=vmem, size = 0x2000, scoped, tag = 'input window, operand 2, single buffered']
    #allocation8 [shape = 'u8[4096]{0}', space=vmem, size = 0x1000, scoped, tag = 'output window, operand 0, single buffered']
    %8 = vsyncpa [#allocation3], 0
    %9 = vsyncpa [#allocation6], 0
    %10 = vsyncpa [#allocation4], 0
    // Predicated region
    $region2: #{tpu_custom_call.1} parent=1 // pred_check
      _
    $region3: #{tpu_custom_call.1} parent=1 // pred_check_branch
      %12 = sbr.rel (0) target = $region5
    $region4: #{tpu_custom_call.1} parent=1 // pred_region
      %s14 = ssub.s32 128, 128
      %15 = vsyncadd [#allocation3], %s14
      %s17 = sshll.u32 [#allocation2], 4
      %s18 = int_to_ptr.vmem [resolvable:$true] %s17
      %20 = dma.hbm_to_vmem [thread:$0]  %s0, 128, %s18, [#allocation3]
    $region5: #{tpu_custom_call.1} parent=1 // pred_fallthru
      _
    // Predicated region
    $region6: #{tpu_custom_call.1} parent=1 // pred_check
      _
    $region7: #{tpu_custom_call.1} parent=1 // pred_check_branch
      %22 = sbr.rel (0) target = $region9
    $region8: #{tpu_custom_call.1} parent=1 // pred_region
      %s24 = ssub.s32 256, 256
      %25 = vsyncadd [#allocation6], %s24
      %s26 = sshll.u32 [#allocation5], 4
      %s27 = int_to_ptr.vmem [resolvable:$true] %s26
      %32 = dma.hbm_to_vmem [thread:$0]  %s1, 256, %s27, [#allocation6], 128, 128, 8
    $region9: #{tpu_custom_call.1} parent=1 // pred_fallthru
      _
    // Predicated region
    $region10: #{tpu_custom_call.1} parent=1 // pred_check
      _
    $region11: #{tpu_custom_call.1} parent=1 // pred_check_branch
      %34 = sbr.rel (0) target = $region13
    $region12: #{tpu_custom_call.1} parent=1 // pred_region
      %s36 = ssub.s32 256, 256
      %37 = vsyncadd [#allocation6], %s36
      %s38 = sshll.u32 [#allocation7], 4
      %s39 = int_to_ptr.vmem [resolvable:$true] %s38
      %44 = dma.hbm_to_vmem [thread:$0]  %s2, 256, %s39, [#allocation6], 128, 128, 8
    $region13: #{tpu_custom_call.1} parent=1 // pred_fallthru
      _
    // Predicated region
    $region14: #{tpu_custom_call.1} parent=1 // pred_check
      _
    $region15: #{tpu_custom_call.1} parent=1 // pred_check_branch
      %46 = sbr.rel (0) target = $region17
    $region16: #{tpu_custom_call.1} parent=1 // pred_region
      %47 = dma.done [#allocation3], 128
    $region17: #{tpu_custom_call.1} parent=1 // pred_fallthru
      _
    // Predicated region
    $region18: #{tpu_custom_call.1} parent=1 // pred_check
      _
    $region19: #{tpu_custom_call.1} parent=1 // pred_check_branch
      %49 = sbr.rel (0) target = $region21
    $region20: #{tpu_custom_call.1} parent=1 // pred_region
      %50 = dma.done [#allocation6], 256
    $region21: #{tpu_custom_call.1} parent=1 // pred_fallthru
      _
    // Predicated region
    $region22: #{tpu_custom_call.1} parent=1 // pred_check
      _
    $region23: #{tpu_custom_call.1} parent=1 // pred_check_branch
      %52 = sbr.rel (0) target = $region25
    $region24: #{tpu_custom_call.1} parent=1 // pred_region
      %53 = dma.done [#allocation6], 256
    $region25: #{tpu_custom_call.1} parent=1 // pred_fallthru
      _
    %v54 = vlaneseq
    %v55 = vshrl.u32 %v54, 7
    %v56 = vadd.s32 %v55, 8
    %v57 = vlaneseq
    %v58 = vand.u32 %v57, 127
    %vm59 = vcmp.eq.s32.totalorder %v55, %v58
    %vm60 = vcmp.eq.s32.totalorder %v56, %v58
    %v61 = vld [vmem:[#allocation5] sm:$0xff]
    %v62 = vld [vmem:[#allocation5 + $0x8] sm:$0xff]
    %v63 = vld [vmem:[#allocation7] sm:$0xff]
    %v64 = vld [vmem:[#allocation7 + $0x8] sm:$0xff]
    %v65 = vsel %vm59, 0.0, %v61
    %v66 = vsel %vm60, 0.0, %v62
    %v67 = vxor.u32 %v65, 2147483648
    %v68 = vxor.u32 %v66, 2147483648
    %v69 = vmul.f32 %v67, 1.442695
    %v70 = vpow.pop %v69
    %v71 = vmul.f32 %v68, 1.442695
    %v72 = vpow.pop %v71
    %v73 = vadd.f32 %v70, 1.0
    %v74 = vadd.f32 %v72, 1.0
    %v75 = vrcp.pop %v73
    %v76 = vmul.f32 1.0, %v75
    %v77 = vrcp.pop %v74
    %v78 = vmul.f32 1.0, %v77
    %v79 = vtanh.pop %v63
    %v80 = vtanh.pop %v64
    %v81 = vmul.f32 %v76, %v79
    %v82 = vmul.f32 %v78, %v80
    %v83 = vadd.f32 %v81, 1.0
    %v84 = vadd.f32 %v82, 1.0
    %v85 = vsel %vm59, %v83, %v81
    %v86 = vsel %vm60, %v84, %v82
    %v87 = vld [vmem:[#allocation2] sm:$0xff]
    %vm88 = vcmask 130048
    %v90 = vsel %vm88, %v85, 0
    %v93 = vsel %vm88, %v86, 0
    %95 = vmatprep.subr.mxu0 0.0
    %96 = vmatpush1.msra.mxu0 %v85
    %97 = vmatprep.subr.mxu0 0.0
    %98 = vmatpush1.msra.mxu0 %v86
    %99 = vmatprep.subr.mxu0 0.0
    %100 = vmatpush1.msra.mxu0 0.0
    %101 = vmatprep.subr.mxu0 0.0
    %102 = vmatpush1.msra.mxu0 0.0
    %103 = vmatprep.subr.mxu0 0.0
    %104 = vmatpush1.msra.mxu0 0.0
    %105 = vmatprep.subr.mxu0 0.0
    %106 = vmatpush1.msra.mxu0 0.0
    %107 = vmatprep.subr.mxu0 0.0
    %108 = vmatpush1.msra.mxu0 0.0
    %109 = vmatprep.subr.mxu0 0.0
    %110 = vmatpush1.msra.mxu0 0.0
    %111 = vmatprep.subr.mxu0 0.0
    %112 = vmatpush1.msra.mxu0 0.0
    %113 = vmatprep.subr.mxu0 0.0
    %114 = vmatpush1.msra.mxu0 0.0
    %115 = vmatprep.subr.mxu0 0.0
    %116 = vmatpush1.msra.mxu0 0.0
    %117 = vmatprep.subr.mxu0 0.0
    %118 = vmatpush1.msra.mxu0 0.0
    %119 = vmatprep.subr.mxu0 0.0
    %120 = vmatpush1.msra.mxu0 0.0
    %121 = vmatprep.subr.mxu0 0.0
    %122 = vmatpush1.msra.mxu0 0.0
    %123 = vmatprep.subr.mxu0 0.0
    %124 = vmatpush1.msra.mxu0 0.0
    %125 = vmatprep.subr.mxu0 0.0
    %126 = vmatpush1.msra.mxu0 0.0
    %127 = vmatprep.subr.mxu0 0.0
    %128 = vmatpush1.msra.mxu0 0.0
    %129 = vmatprep.subr.mxu0 0.0
    %130 = vmatpush1.msra.mxu0 0.0
    %131 = vmatprep.subr.mxu0 0.0
    %132 = vmatpush1.msra.mxu0 0.0
    %133 = vmatprep.subr.mxu0 0.0
    %134 = vmatpush1.msra.mxu0 0.0
    %135 = vmatprep.subr.mxu0 0.0
    %136 = vmatpush1.msra.mxu0 0.0
    %137 = vmatprep.subr.mxu0 0.0
    %138 = vmatpush1.msra.mxu0 0.0
    %139 = vmatprep.subr.mxu0 0.0
    %140 = vmatpush1.msra.mxu0 0.0
    %141 = vmatprep.subr.mxu0 0.0
    %142 = vmatpush1.msra.mxu0 0.0
    %143 = vmatprep.subr.mxu0 0.0
    %144 = vmatpush1.msra.mxu0 0.0
    %145 = vmatprep.subr.mxu0 0.0
    %146 = vmatpush1.msra.mxu0 0.0
    %147 = vmatprep.subr.mxu0 0.0
    %148 = vmatpush1.msra.mxu0 0.0
    %149 = vmatprep.subr.mxu0 0.0
    %150 = vmatpush1.msra.mxu0 0.0
    %151 = vmatprep.subr.mxu0 0.0
    %152 = vmatpush1.msra.mxu0 0.0
    %153 = vmatprep.subr.mxu0 0.0
    %154 = vmatpush1.msra.mxu0 0.0
    %155 = vmatprep.subr.mxu0 0.0
    %156 = vmatpush1.msra.mxu0 0.0
    %157 = vmatprep.subr.mxu0 0.0
    %158 = vmatpush1.msra.mxu0 0.0
    %159 = vmatprep.mubr.f32.mxu0 0.0
    %160 = vmatmul.mubr.f32.gmra.mrb[0].mxu0 %v90
    %v161 = vpop.f32.mrb[0].mxu0
    %v162 = vadd.f32 0.0, %v161
    %v163 = vpop.f32.mrb[0].mxu0
    %164 = vmatprep.mubr.f32.mxu0 0.0
    %165 = vmatmul.mubr.f32.gmra.mrb[0].mxu0 %v93
    %v166 = vpop.f32.mrb[0].mxu0
    %v167 = vadd.f32 0.0, %v166
    %v168 = vpop.f32.mrb[0].mxu0
    %169 = vdwg.mxu0
    %v171 = vsel %vm88, %v162, 0
    %v174 = vsel %vm88, %v167, 0
    %176 = vmatprep.subr.mxu0 0.0
    %177 = vmatpush1.msra.mxu0 %v162
    %178 = vmatprep.subr.mxu0 0.0
    %179 = vmatpush1.msra.mxu0 %v167
    %180 = vmatprep.subr.mxu0 0.0
    %181 = vmatpush1.msra.mxu0 0.0
    %182 = vmatprep.subr.mxu0 0.0
    %183 = vmatpush1.msra.mxu0 0.0
    %184 = vmatprep.subr.mxu0 0.0
    %185 = vmatpush1.msra.mxu0 0.0
    %186 = vmatprep.subr.mxu0 0.0
    %187 = vmatpush1.msra.mxu0 0.0
    %188 = vmatprep.subr.mxu0 0.0
    %189 = vmatpush1.msra.mxu0 0.0
    %190 = vmatprep.subr.mxu0 0.0
    %191 = vmatpush1.msra.mxu0 0.0
    %192 = vmatprep.subr.mxu0 0.0
    %193 = vmatpush1.msra.mxu0 0.0
    %194 = vmatprep.subr.mxu0 0.0
    %195 = vmatpush1.msra.mxu0 0.0
    %196 = vmatprep.subr.mxu0 0.0
    %197 = vmatpush1.msra.mxu0 0.0
    %198 = vmatprep.subr.mxu0 0.0
    %199 = vmatpush1.msra.mxu0 0.0
    %200 = vmatprep.subr.mxu0 0.0
    %201 = vmatpush1.msra.mxu0 0.0
    %202 = vmatprep.subr.mxu0 0.0
    %203 = vmatpush1.msra.mxu0 0.0
    %204 = vmatprep.subr.mxu0 0.0
    %205 = vmatpush1.msra.mxu0 0.0
    %206 = vmatprep.subr.mxu0 0.0
    %207 = vmatpush1.msra.mxu0 0.0
    %208 = vmatprep.subr.mxu0 0.0
    %209 = vmatpush1.msra.mxu0 0.0
    %210 = vmatprep.subr.mxu0 0.0
    %211 = vmatpush1.msra.mxu0 0.0
    %212 = vmatprep.subr.mxu0 0.0
    %213 = vmatpush1.msra.mxu0 0.0
    %214 = vmatprep.subr.mxu0 0.0
    %215 = vmatpush1.msra.mxu0 0.0
    %216 = vmatprep.subr.mxu0 0.0
    %217 = vmatpush1.msra.mxu0 0.0
    %218 = vmatprep.subr.mxu0 0.0
    %219 = vmatpush1.msra.mxu0 0.0
    %220 = vmatprep.subr.mxu0 0.0
    %221 = vmatpush1.msra.mxu0 0.0
    %222 = vmatprep.subr.mxu0 0.0
    %223 = vmatpush1.msra.mxu0 0.0
    %224 = vmatprep.subr.mxu0 0.0
    %225 = vmatpush1.msra.mxu0 0.0
    %226 = vmatprep.subr.mxu0 0.0
    %227 = vmatpush1.msra.mxu0 0.0
    %228 = vmatprep.subr.mxu0 0.0
    %229 = vmatpush1.msra.mxu0 0.0
    %230 = vmatprep.subr.mxu0 0.0
    %231 = vmatpush1.msra.mxu0 0.0
    %232 = vmatprep.subr.mxu0 0.0
    %233 = vmatpush1.msra.mxu0 0.0
    %234 = vmatprep.subr.mxu0 0.0
    %235 = vmatpush1.msra.mxu0 0.0
    %236 = vmatprep.subr.mxu0 0.0
    %237 = vmatpush1.msra.mxu0 0.0
    %238 = vmatprep.subr.mxu0 0.0
    %239 = vmatpush1.msra.mxu0 0.0
    %240 = vmatprep.mubr.f32.mxu0 0.0
    %241 = vmatmul.mubr.f32.gmra.mrb[0].mxu0 %v171
    %v242 = vpop.f32.mrb[0].mxu0
    %v243 = vadd.f32 0.0, %v242
    %v244 = vpop.f32.mrb[0].mxu0
    %245 = vmatprep.mubr.f32.mxu0 0.0
    %246 = vmatmul.mubr.f32.gmra.mrb[0].mxu0 %v174
    %v247 = vpop.f32.mrb[0].mxu0
    %v248 = vadd.f32 0.0, %v247
    %v249 = vpop.f32.mrb[0].mxu0
    %250 = vdwg.mxu0
    %v252 = vsel %vm88, %v243, 0
    %v255 = vsel %vm88, %v248, 0
    %257 = vmatprep.subr.mxu0 0.0
    %258 = vmatpush1.msra.mxu0 %v243
    %259 = vmatprep.subr.mxu0 0.0
    %260 = vmatpush1.msra.mxu0 %v248
    %261 = vmatprep.subr.mxu0 0.0
    %262 = vmatpush1.msra.mxu0 0.0
    %263 = vmatprep.subr.mxu0 0.0
    %264 = vmatpush1.msra.mxu0 0.0
    %265 = vmatprep.subr.mxu0 0.0
    %266 = vmatpush1.msra.mxu0 0.0
    %267 = vmatprep.subr.mxu0 0.0
    %268 = vmatpush1.msra.mxu0 0.0
    %269 = vmatprep.subr.mxu0 0.0
    %270 = vmatpush1.msra.mxu0 0.0
    %271 = vmatprep.subr.mxu0 0.0
    %272 = vmatpush1.msra.mxu0 0.0
    %273 = vmatprep.subr.mxu0 0.0
    %274 = vmatpush1.msra.mxu0 0.0
    %275 = vmatprep.subr.mxu0 0.0
    %276 = vmatpush1.msra.mxu0 0.0
    %277 = vmatprep.subr.mxu0 0.0
    %278 = vmatpush1.msra.mxu0 0.0
    %279 = vmatprep.subr.mxu0 0.0
    %280 = vmatpush1.msra.mxu0 0.0
    %281 = vmatprep.subr.mxu0 0.0
    %282 = vmatpush1.msra.mxu0 0.0
    %283 = vmatprep.subr.mxu0 0.0
    %284 = vmatpush1.msra.mxu0 0.0
    %285 = vmatprep.subr.mxu0 0.0
    %286 = vmatpush1.msra.mxu0 0.0
    %287 = vmatprep.subr.mxu0 0.0
    %288 = vmatpush1.msra.mxu0 0.0
    %289 = vmatprep.subr.mxu0 0.0
    %290 = vmatpush1.msra.mxu0 0.0
    %291 = vmatprep.subr.mxu0 0.0
    %292 = vmatpush1.msra.mxu0 0.0
    %293 = vmatprep.subr.mxu0 0.0
    %294 = vmatpush1.msra.mxu0 0.0
    %295 = vmatprep.subr.mxu0 0.0
    %296 = vmatpush1.msra.mxu0 0.0
    %297 = vmatprep.subr.mxu0 0.0
    %298 = vmatpush1.msra.mxu0 0.0
    %299 = vmatprep.subr.mxu0 0.0
    %300 = vmatpush1.msra.mxu0 0.0
    %301 = vmatprep.subr.mxu0 0.0
    %302 = vmatpush1.msra.mxu0 0.0
    %303 = vmatprep.subr.mxu0 0.0
    %304 = vmatpush1.msra.mxu0 0.0
    %305 = vmatprep.subr.mxu0 0.0
    %306 = vmatpush1.msra.mxu0 0.0
    %307 = vmatprep.subr.mxu0 0.0
    %308 = vmatpush1.msra.mxu0 0.0
    %309 = vmatprep.subr.mxu0 0.0
    %310 = vmatpush1.msra.mxu0 0.0
    %311 = vmatprep.subr.mxu0 0.0
    %312 = vmatpush1.msra.mxu0 0.0
    %313 = vmatprep.subr.mxu0 0.0
    %314 = vmatpush1.msra.mxu0 0.0
    %315 = vmatprep.subr.mxu0 0.0
    %316 = vmatpush1.msra.mxu0 0.0
    %317 = vmatprep.subr.mxu0 0.0
    %318 = vmatpush1.msra.mxu0 0.0
    %319 = vmatprep.subr.mxu0 0.0
    %320 = vmatpush1.msra.mxu0 0.0
    %321 = vmatprep.mubr.f32.mxu0 0.0
    %322 = vmatmul.mubr.f32.gmra.mrb[0].mxu0 %v252
    %v323 = vpop.f32.mrb[0].mxu0
    %v324 = vadd.f32 0.0, %v323
    %v325 = vpop.f32.mrb[0].mxu0
    %326 = vmatprep.mubr.f32.mxu0 0.0
    %327 = vmatmul.mubr.f32.gmra.mrb[0].mxu0 %v255
    %v328 = vpop.f32.mrb[0].mxu0
    %v329 = vadd.f32 0.0, %v328
    %v330 = vpop.f32.mrb[0].mxu0
    %331 = vdwg.mxu0
    %v333 = vsel %vm88, %v324, 0
    %v336 = vsel %vm88, %v329, 0
    %338 = vmatprep.subr.mxu0 0.0
    %339 = vmatpush1.msra.mxu0 %v324
    %340 = vmatprep.subr.mxu0 0.0
    %341 = vmatpush1.msra.mxu0 %v329
    %342 = vmatprep.subr.mxu0 0.0
    %343 = vmatpush1.msra.mxu0 0.0
    %344 = vmatprep.subr.mxu0 0.0
    %345 = vmatpush1.msra.mxu0 0.0
    %346 = vmatprep.subr.mxu0 0.0
    %347 = vmatpush1.msra.mxu0 0.0
    %348 = vmatprep.subr.mxu0 0.0
    %349 = vmatpush1.msra.mxu0 0.0
    %350 = vmatprep.subr.mxu0 0.0
    %351 = vmatpush1.msra.mxu0 0.0
    %352 = vmatprep.subr.mxu0 0.0
    %353 = vmatpush1.msra.mxu0 0.0
    %354 = vmatprep.subr.mxu0 0.0
    %355 = vmatpush1.msra.mxu0 0.0
    %356 = vmatprep.subr.mxu0 0.0
    %357 = vmatpush1.msra.mxu0 0.0
    %358 = vmatprep.subr.mxu0 0.0
    %359 = vmatpush1.msra.mxu0 0.0
    %360 = vmatprep.subr.mxu0 0.0
    %361 = vmatpush1.msra.mxu0 0.0
    %362 = vmatprep.subr.mxu0 0.0
    %363 = vmatpush1.msra.mxu0 0.0
    %364 = vmatprep.subr.mxu0 0.0
    %365 = vmatpush1.msra.mxu0 0.0
    %366 = vmatprep.subr.mxu0 0.0
    %367 = vmatpush1.msra.mxu0 0.0
    %368 = vmatprep.subr.mxu0 0.0
    %369 = vmatpush1.msra.mxu0 0.0
    %370 = vmatprep.subr.mxu0 0.0
    %371 = vmatpush1.msra.mxu0 0.0
    %372 = vmatprep.subr.mxu0 0.0
    %373 = vmatpush1.msra.mxu0 0.0
    %374 = vmatprep.subr.mxu0 0.0
    %375 = vmatpush1.msra.mxu0 0.0
    %376 = vmatprep.subr.mxu0 0.0
    %377 = vmatpush1.msra.mxu0 0.0
    %378 = vmatprep.subr.mxu0 0.0
    %379 = vmatpush1.msra.mxu0 0.0
    %380 = vmatprep.subr.mxu0 0.0
    %381 = vmatpush1.msra.mxu0 0.0
    %382 = vmatprep.subr.mxu0 0.0
    %383 = vmatpush1.msra.mxu0 0.0
    %384 = vmatprep.subr.mxu0 0.0
    %385 = vmatpush1.msra.mxu0 0.0
    %386 = vmatprep.subr.mxu0 0.0
    %387 = vmatpush1.msra.mxu0 0.0
    %388 = vmatprep.subr.mxu0 0.0
    %389 = vmatpush1.msra.mxu0 0.0
    %390 = vmatprep.subr.mxu0 0.0
    %391 = vmatpush1.msra.mxu0 0.0
    %392 = vmatprep.subr.mxu0 0.0
    %393 = vmatpush1.msra.mxu0 0.0
    %394 = vmatprep.subr.mxu0 0.0
    %395 = vmatpush1.msra.mxu0 0.0
    %396 = vmatprep.subr.mxu0 0.0
    %397 = vmatpush1.msra.mxu0 0.0
    %398 = vmatprep.subr.mxu0 0.0
    %399 = vmatpush1.msra.mxu0 0.0
    %400 = vmatprep.subr.mxu0 0.0
    %401 = vmatpush1.msra.mxu0 0.0
    %402 = vmatprep.mubr.f32.mxu0 0.0
    %403 = vmatmul.mubr.f32.gmra.mrb[0].mxu0 %v333
    %v404 = vpop.f32.mrb[0].mxu0
    %v405 = vadd.f32 0.0, %v404
    %v406 = vpop.f32.mrb[0].mxu0
    %407 = vmatprep.mubr.f32.mxu0 0.0
    %408 = vmatmul.mubr.f32.gmra.mrb[0].mxu0 %v336
    %v409 = vpop.f32.mrb[0].mxu0
    %v410 = vadd.f32 0.0, %v409
    %v411 = vpop.f32.mrb[0].mxu0
    %412 = vdwg.mxu0
    %v414 = vsel %vm88, %v87, 0
    %416 = vmatprep.subr.mxu0 0.0
    %417 = vmatpush1.msra.mxu0 %v405
    %418 = vmatprep.subr.mxu0 0.0
    %419 = vmatpush1.msra.mxu0 %v410
    %420 = vmatprep.subr.mxu0 0.0
    %421 = vmatpush1.msra.mxu0 0.0
    %422 = vmatprep.subr.mxu0 0.0
    %423 = vmatpush1.msra.mxu0 0.0
    %424 = vmatprep.subr.mxu0 0.0
    %425 = vmatpush1.msra.mxu0 0.0
    %426 = vmatprep.subr.mxu0 0.0
    %427 = vmatpush1.msra.mxu0 0.0
    %428 = vmatprep.subr.mxu0 0.0
    %429 = vmatpush1.msra.mxu0 0.0
    %430 = vmatprep.subr.mxu0 0.0
    %431 = vmatpush1.msra.mxu0 0.0
    %432 = vmatprep.subr.mxu0 0.0
    %433 = vmatpush1.msra.mxu0 0.0
    %434 = vmatprep.subr.mxu0 0.0
    %435 = vmatpush1.msra.mxu0 0.0
    %436 = vmatprep.subr.mxu0 0.0
    %437 = vmatpush1.msra.mxu0 0.0
    %438 = vmatprep.subr.mxu0 0.0
    %439 = vmatpush1.msra.mxu0 0.0
    %440 = vmatprep.subr.mxu0 0.0
    %441 = vmatpush1.msra.mxu0 0.0
    %442 = vmatprep.subr.mxu0 0.0
    %443 = vmatpush1.msra.mxu0 0.0
    %444 = vmatprep.subr.mxu0 0.0
    %445 = vmatpush1.msra.mxu0 0.0
    %446 = vmatprep.subr.mxu0 0.0
    %447 = vmatpush1.msra.mxu0 0.0
    %448 = vmatprep.subr.mxu0 0.0
    %449 = vmatpush1.msra.mxu0 0.0
    %450 = vmatprep.subr.mxu0 0.0
    %451 = vmatpush1.msra.mxu0 0.0
    %452 = vmatprep.subr.mxu0 0.0
    %453 = vmatpush1.msra.mxu0 0.0
    %454 = vmatprep.subr.mxu0 0.0
    %455 = vmatpush1.msra.mxu0 0.0
    %456 = vmatprep.subr.mxu0 0.0
    %457 = vmatpush1.msra.mxu0 0.0
    %458 = vmatprep.subr.mxu0 0.0
    %459 = vmatpush1.msra.mxu0 0.0
    %460 = vmatprep.subr.mxu0 0.0
    %461 = vmatpush1.msra.mxu0 0.0
    %462 = vmatprep.subr.mxu0 0.0
    %463 = vmatpush1.msra.mxu0 0.0
    %464 = vmatprep.subr.mxu0 0.0
    %465 = vmatpush1.msra.mxu0 0.0
    %466 = vmatprep.subr.mxu0 0.0
    %467 = vmatpush1.msra.mxu0 0.0
    %468 = vmatprep.subr.mxu0 0.0
    %469 = vmatpush1.msra.mxu0 0.0
    %470 = vmatprep.subr.mxu0 0.0
    %471 = vmatpush1.msra.mxu0 0.0
    %472 = vmatprep.subr.mxu0 0.0
    %473 = vmatpush1.msra.mxu0 0.0
    %474 = vmatprep.subr.mxu0 0.0
    %475 = vmatpush1.msra.mxu0 0.0
    %476 = vmatprep.subr.mxu0 0.0
    %477 = vmatpush1.msra.mxu0 0.0
    %478 = vmatprep.subr.mxu0 0.0
    %479 = vmatpush1.msra.mxu0 0.0
    %480 = vmatprep.mubr.f32.mxu0 0.0
    %481 = vmatmul.mubr.f32.gmra.mrb[0].mxu0 %v414
    %v482 = vpop.f32.mrb[0].mxu0
    %v483 = vadd.f32 0.0, %v482
    %v484 = vpop.f32.mrb[0].mxu0
    %485 = vdwg.mxu0
    %486 = vst.msk [vmem:[#allocation8] sm:$0xff] %vm88, %v483
    // Predicated region
    $region26: #{tpu_custom_call.1} parent=1 // pred_check
      _
    $region27: #{tpu_custom_call.1} parent=1 // pred_check_branch
      %488 = sbr.rel (0) target = $region29
    $region28: #{tpu_custom_call.1} parent=1 // pred_region
      %s490 = ssub.s32 128, 128
      %491 = vsyncadd [#allocation4], %s490
      %s493 = sshll.u32 [#allocation8], 4
      %s494 = int_to_ptr.vmem [resolvable:$true] %s493
      %496 = dma.vmem_to_hbm [thread:$0]  %s494, 128, %s3, [#allocation4]
    $region29: #{tpu_custom_call.1} parent=1 // pred_fallthru
      _
    // Predicated region
    $region30: #{tpu_custom_call.1} parent=1 // pred_check
      _
    $region31: #{tpu_custom_call.1} parent=1 // pred_check_branch
      %498 = sbr.rel (0) target = $region33
    $region32: #{tpu_custom_call.1} parent=1 // pred_region
      %499 = dma.done [#allocation4], 128
    $region33: #{tpu_custom_call.1} parent=1 // pred_fallthru
      _
    %500 = vsyncpa [#allocation3], 1
    %501 = vsyncpa [#allocation6], 1
    %502 = vsyncpa [#allocation4], 1

</llo_original>
